<compile_context>
chip_gen: v7x
topology: tpu7x:2x2x1
jax: 0.10.0
libtpu: 0.0.40
codegen_flags: <defaults>
</compile_context>

<pallas_src>
import jax
import jax.numpy as jnp
import numpy as np
from jax.experimental import pallas as pl
from jax.experimental.pallas import tpu as pltpu


LANE = 128


def _round_up(n: int, m: int) -> int:
    return ((n + m - 1) // m) * m


def critic_kernel(x_ref, a_ref, w1x_ref, w1a_ref, b1w2_ref, b2_ref, o_ref):
    # fc1: two accumulated MXU matmuls over the raw (un-padded) features --
    # no concat / K-padding materialized in HBM.
    h = jnp.dot(x_ref[...], w1x_ref[...], preferred_element_type=jnp.float32)
    h = h + jnp.dot(a_ref[...], w1a_ref[...],
                    preferred_element_type=jnp.float32)
    bw = b1w2_ref[...]                               # row 0 = b1, row 1 = w2
    h = jnp.maximum(h + bw[0:1, :], 0.0)             # bias + ReLU on the VPU
    # fc2 (H -> 1): VPU multiply + XLU lane reduction -> per-row scalar,
    # written lane-dense (batch along lanes) to avoid masked partial stores.
    out = jnp.sum(h * bw[1:2, :], axis=-1) + b2_ref[0]        # (TB,)
    o_ref[...] = out[None, :].astype(o_ref.dtype)             # (1, TB)


def prepare_params(w1, b1, w2, b2, obs_dim, action_dim):
    """One-time parameter preprocessing (hoisted out of the forward path).

    w1: (hidden, obs_dim + action_dim), b1: (hidden,)
    w2: (1, hidden),                    b2: (1,)

    W1 is transposed and split into an obs slab and an action slab so the
    kernel consumes x and a directly (no concat); the hidden dim is padded to
    a lane multiple with zeros, which keeps the math exact.
    """
    hidden = w1.shape[0]
    H_pad = _round_up(hidden, LANE)

    w1_t = jnp.transpose(w1).astype(jnp.float32)     # (obs+act, hidden)
    w1x = jnp.zeros((obs_dim, H_pad), jnp.float32).at[:, :hidden].set(
        w1_t[:obs_dim])
    w1a = jnp.zeros((action_dim, H_pad), jnp.float32).at[:, :hidden].set(
        w1_t[obs_dim:])
    b1w2 = (jnp.zeros((2, H_pad), jnp.float32)
            .at[0, :hidden].set(b1.astype(jnp.float32))
            .at[1, :hidden].set(w2[0].astype(jnp.float32)))
    b2_1d = b2.reshape(1).astype(jnp.float32)

    return dict(w1x=w1x, w1a=w1a, b1w2=b1w2, b2=b2_1d,
                obs_dim=int(obs_dim), action_dim=int(action_dim), H_pad=H_pad)


def critic_forward(x, a, params, *, block_b=1024):
    """x: (B, obs_dim), a: (B, action_dim) -> (B, 1) float32."""
    B = x.shape[0]
    obs_dim = params["obs_dim"]
    action_dim = params["action_dim"]
    H_pad = params["H_pad"]

    # Tile selection: minimise batch padding, keep TB a lane multiple when
    # tiling, and use >=2 grid steps when B > 128 (v7x has 2 TensorCores).
    ntiles = max(pl.cdiv(B, block_b), 1)
    if ntiles == 1 and B > 128:
        ntiles = 2
    if ntiles > 1:
        TB = _round_up(pl.cdiv(B, ntiles), LANE)
        ntiles = pl.cdiv(B, TB)          # re-derive: no tile starts past B
    if ntiles == 1:
        TB = B                           # single full-array block, no padding
    B_pad = ntiles * TB

    x = x.astype(jnp.float32)
    a = a.astype(jnp.float32)
    # TODO(synk): optional bf16 streaming of x/a/W1 (f32 accumulation) would
    # halve remaining HBM traffic but requires looser test tolerances.

    out = pl.pallas_call(
        critic_kernel,
        out_shape=jax.ShapeDtypeStruct((1, B_pad), jnp.float32),
        grid=(ntiles,),
        in_specs=[
            pl.BlockSpec((TB, obs_dim), lambda i: (i, 0)),        # x stream
            pl.BlockSpec((TB, action_dim), lambda i: (i, 0)),     # a stream
            pl.BlockSpec((obs_dim, H_pad), lambda i: (0, 0)),     # W1 obs slab
            pl.BlockSpec((action_dim, H_pad), lambda i: (0, 0)),  # W1 act slab
            pl.BlockSpec((2, H_pad), lambda i: (0, 0)),           # [b1; w2]
            pl.BlockSpec(memory_space=pltpu.MemorySpace.SMEM),    # b2 scalar
        ],
        out_specs=pl.BlockSpec((1, TB), lambda i: (0, i)),        # lane-dense
        compiler_params=pltpu.CompilerParams(
            dimension_semantics=("parallel",)),
    )(x, a, params["w1x"], params["w1a"], params["b1w2"], params["b2"])

    # (1, B_pad) lane-dense rows -> (B, 1) column; padded/garbage tail cut.
    return out[0, :B][:, None]


def init_params(key, obs_dim, hidden_dim, action_dim, init_w=0.003):
    """Init mirroring the PyTorch module: fc1 default uniform(+-1/sqrt(fan_in)),
    fc2 uniform(+-init_w) as set explicitly in __init__."""
    k1, k2, k3, k4 = jax.random.split(key, 4)
    fan_in1 = obs_dim + action_dim
    bound1 = 1.0 / np.sqrt(fan_in1)
    w1 = jax.random.uniform(k1, (hidden_dim, fan_in1), jnp.float32, -bound1, bound1)
    b1 = jax.random.uniform(k2, (hidden_dim,), jnp.float32, -bound1, bound1)
    w2 = jax.random.uniform(k3, (1, hidden_dim), jnp.float32, -init_w, init_w)
    b2 = jax.random.uniform(k4, (1,), jnp.float32, -init_w, init_w)
    return w1, b1, w2, b2


def critic_ref(x, a, w1, b1, w2, b2):
    cat = jnp.concatenate([x, a], axis=1)
    h = jnp.maximum(
        jnp.dot(cat, w1.T, precision=jax.lax.Precision.HIGHEST) + b1, 0.0)
    return jnp.dot(h, w2.T, precision=jax.lax.Precision.HIGHEST) + b2


if __name__ == "__main__":
    batch, obs_dim, action_dim, hidden_dim = 8, 16, 8, 32

    key = jax.random.PRNGKey(0)
    kx, ka, kp = jax.random.split(key, 3)
    x = jax.random.normal(kx, (batch, obs_dim), jnp.float32)
    a = jax.random.normal(ka, (batch, action_dim), jnp.float32)
    w1, b1, w2, b2 = init_params(kp, obs_dim, hidden_dim, action_dim)

    params = prepare_params(w1, b1, w2, b2, obs_dim, action_dim)

    # Single-tile path (grid of 1, block = full batch, no padding at all).
    out = jax.block_until_ready(critic_forward(x, a, params))
    expected = critic_ref(x, a, w1, b1, w2, b2)
    np.testing.assert_allclose(np.asarray(out), np.asarray(expected),
                               rtol=1e-5, atol=1e-5)
    assert out.shape == (batch, 1)

    # Multi-tile path: 300 rows with block_b=128 -> grid of 3, ragged
    # (partial) last tile; exercises lane-dense multi-block output stores.
    batch2 = 300
    x2 = jax.random.normal(jax.random.PRNGKey(1), (batch2, obs_dim), jnp.float32)
    a2 = jax.random.normal(jax.random.PRNGKey(2), (batch2, action_dim), jnp.float32)
    out2 = jax.block_until_ready(critic_forward(x2, a2, params, block_b=128))
    expected2 = critic_ref(x2, a2, w1, b1, w2, b2)
    np.testing.assert_allclose(np.asarray(out2), np.asarray(expected2),
                               rtol=1e-5, atol=1e-5)
    assert out2.shape == (batch2, 1)

    print("KERNEL_OK")
</pallas_src>

<mosaic_0001>
module attributes {stable_mosaic.version = 11 : i64} {
  func.func @critic_kernel(%arg0: i32, %arg1: memref<8x16xf32, #tpu.memory_space<vmem>>, %arg2: memref<8x8xf32, #tpu.memory_space<vmem>>, %arg3: memref<16x128xf32, #tpu.memory_space<vmem>>, %arg4: memref<8x128xf32, #tpu.memory_space<vmem>>, %arg5: memref<2x128xf32, #tpu.memory_space<vmem>>, %arg6: memref<1xf32, #tpu.memory_space<smem>>, %arg7: memref<1x8xf32, #tpu.memory_space<vmem>>) attributes {dimension_semantics = [#tpu.dimension_semantics<parallel>], iteration_bounds = array<i64: 1>, scalar_prefetch = 0 : i64, scratch_operands = 0 : i64, tpu.core_type = #tpu.core_type<tc>, window_params = [{transform_indices = @transform_0, window_bounds = array<i64: 8, 16>}, {transform_indices = @transform_1, window_bounds = array<i64: 8, 8>}, {pipeline_mode = #tpu.pipeline_mode<synchronous>, transform_indices = @transform_2, window_bounds = array<i64: 16, 128>}, {pipeline_mode = #tpu.pipeline_mode<synchronous>, transform_indices = @transform_3, window_bounds = array<i64: 8, 128>}, {pipeline_mode = #tpu.pipeline_mode<synchronous>, transform_indices = @transform_4, window_bounds = array<i64: 2, 128>}, {transform_indices = @transform_5, window_bounds = array<i64: 1>}, {transform_indices = @transform_6, window_bounds = array<i64: 1, 8>}]} {
    %c0 = arith.constant 0 : index
    %c0_0 = arith.constant 0 : index
    %0 = vector.load %arg1[%c0, %c0_0] : memref<8x16xf32, #tpu.memory_space<vmem>>, vector<8x16xf32>
    %c0_1 = arith.constant 0 : index
    %c0_2 = arith.constant 0 : index
    %1 = vector.load %arg3[%c0_1, %c0_2] : memref<16x128xf32, #tpu.memory_space<vmem>>, vector<16x128xf32>
    %cst = arith.constant dense<0.000000e+00> : vector<8x128xf32>
    %2 = tpu.matmul %0, %1, %cst {dimension_numbers = #tpu.dot_dimension_numbers<[1], [0], [0], [1], [0, 0, 1, 1], [], []>} : vector<8x16xf32>, vector<16x128xf32>, vector<8x128xf32> -> vector<8x128xf32>
    %c0_3 = arith.constant 0 : index
    %c0_4 = arith.constant 0 : index
    %3 = vector.load %arg2[%c0_3, %c0_4] : memref<8x8xf32, #tpu.memory_space<vmem>>, vector<8x8xf32>
    %c0_5 = arith.constant 0 : index
    %c0_6 = arith.constant 0 : index
    %4 = vector.load %arg4[%c0_5, %c0_6] : memref<8x128xf32, #tpu.memory_space<vmem>>, vector<8x128xf32>
    %cst_7 = arith.constant dense<0.000000e+00> : vector<8x128xf32>
    %5 = tpu.matmul %3, %4, %cst_7 {dimension_numbers = #tpu.dot_dimension_numbers<[1], [0], [0], [1], [0, 0, 1, 1], [], []>} : vector<8x8xf32>, vector<8x128xf32>, vector<8x128xf32> -> vector<8x128xf32>
    %6 = arith.addf %2, %5 : vector<8x128xf32>
    %c0_8 = arith.constant 0 : index
    %c0_9 = arith.constant 0 : index
    %7 = vector.load %arg5[%c0_8, %c0_9] : memref<2x128xf32, #tpu.memory_space<vmem>>, vector<2x128xf32>
    %8 = vector.extract_strided_slice %7 {offsets = [0, 0], sizes = [1, 128], strides = [1, 1]} : vector<2x128xf32> to vector<1x128xf32>
    %9 = vector.broadcast %8 : vector<1x128xf32> to vector<8x128xf32>
    %10 = arith.addf %6, %9 : vector<8x128xf32>
    %cst_10 = arith.constant 0.000000e+00 : f32
    %11 = vector.broadcast %cst_10 : f32 to vector<8x128xf32>
    %12 = arith.maximumf %10, %11 : vector<8x128xf32>
    %13 = vector.extract_strided_slice %7 {offsets = [1, 0], sizes = [1, 128], strides = [1, 1]} : vector<2x128xf32> to vector<1x128xf32>
    %14 = vector.broadcast %13 : vector<1x128xf32> to vector<8x128xf32>
    %15 = arith.mulf %12, %14 : vector<8x128xf32>
    %cst_11 = arith.constant dense<0.000000e+00> : vector<8xf32>
    %16 = vector.multi_reduction <add>, %15, %cst_11 [1] : vector<8x128xf32> to vector<8xf32>
    %c0_12 = arith.constant 0 : index
    %17 = memref.load %arg6[%c0_12] : memref<1xf32, #tpu.memory_space<smem>>
    %18 = vector.broadcast %17 : f32 to vector<8xf32>
    %19 = arith.addf %16, %18 : vector<8xf32>
    %20 = vector.shape_cast %19 : vector<8xf32> to vector<1x8xf32>
    %c0_13 = arith.constant 0 : index
    %c0_14 = arith.constant 0 : index
    %21 = vector.load %arg7[%c0_13, %c0_14] : memref<1x8xf32, #tpu.memory_space<vmem>>, vector<1x8xf32>
    tpu.vector_store %arg7[%c0_13, %c0_14], %20 {strides = array<i32>} : memref<1x8xf32, #tpu.memory_space<vmem>>, vector<1x8xf32>,
    return
  }
  func.func @transform_0(%arg0: i32) -> (i32, i32) {
    %c0_i32 = arith.constant 0 : i32
    %c0_i32_0 = arith.constant 0 : i32
    return %arg0, %c0_i32 : i32, i32
  }
  func.func @transform_1(%arg0: i32) -> (i32, i32) {
    %c0_i32 = arith.constant 0 : i32
    %c0_i32_0 = arith.constant 0 : i32
    return %arg0, %c0_i32 : i32, i32
  }
  func.func @transform_2(%arg0: i32) -> (i32, i32) {
    %c0_i32 = arith.constant 0 : i32
    %c0_i32_0 = arith.constant 0 : i32
    %c0_i32_1 = arith.constant 0 : i32
    return %c0_i32, %c0_i32_0 : i32, i32
  }
  func.func @transform_3(%arg0: i32) -> (i32, i32) {
    %c0_i32 = arith.constant 0 : i32
    %c0_i32_0 = arith.constant 0 : i32
    %c0_i32_1 = arith.constant 0 : i32
    return %c0_i32, %c0_i32_0 : i32, i32
  }
  func.func @transform_4(%arg0: i32) -> (i32, i32) {
    %c0_i32 = arith.constant 0 : i32
    %c0_i32_0 = arith.constant 0 : i32
    %c0_i32_1 = arith.constant 0 : i32
    return %c0_i32, %c0_i32_0 : i32, i32
  }
  func.func @transform_5(%arg0: i32) -> i32 {
    %c0_i32 = arith.constant 0 : i32
    %c0_i32_0 = arith.constant 0 : i32
    return %c0_i32 : i32
  }
  func.func @transform_6(%arg0: i32) -> (i32, i32) {
    %c0_i32 = arith.constant 0 : i32
    %c0_i32_0 = arith.constant 0 : i32
    return %c0_i32, %arg0 : i32, i32
  }
}

</mosaic_0001>

<llo_original>
// kernel: tpu_custom_call.1
$region0: #{tpu_custom_call.1}
  #allocation0 [shape = 'u32[]', space=smem, size = 0x4, offset = 0x4, fixed_abs, tag = 'smem constant byte address 0x4 - core index']
  #allocation1 [shape = 'u32[144,128]{1,0:T(1,128)}', space=vmem, size = 0x12000, scoped, tag = 'internal scratch']
  #allocation2 [shape = 'f32[1]{0:T(128)S(6)}', space=smem, size = 0x200, scoped, tag = 'scoped memory for tpu_custom_call.1']
  %s0 = inlined_call_operand.hbm [shape: f32[8,16], index: 0, kind: input, shape index: {}]
  %s1 = inlined_call_operand.hbm [shape: f32[8,8], index: 1, kind: input, shape index: {}]
  %s2 = inlined_call_operand.hbm [shape: f32[16,128], index: 2, kind: input, shape index: {}]
  %s3 = inlined_call_operand.vmem [shape: f32[8,128], index: 3, kind: input, shape index: {}]
  %s4 = inlined_call_operand.vmem [shape: f32[2,128], index: 4, kind: input, shape index: {}]
  %s5 = inlined_call_operand.<no memory space> [shape: f32[1], index: 5, kind: input, shape index: {}]
  %s6 = inlined_call_operand.hbm [shape: f32[1,8], index: 6, kind: output, shape index: {}]
  %s7 = sld [smem:[#allocation0]]
  $region46: #{tpu_custom_call.1} parent=0
    _
  %s9 = ssub.s32 1, %s7
  %s10 = scalar_select 0, %s9, %s7
  %11 = sst [smem:[#allocation2]] %s5
  $region1: #{tpu_custom_call.1} parent=0
    #allocation3 [shape = 'u8[4096]{0}', space=vmem, size = 0x1000, scoped, tag = 'input window, operand 0, single buffered']
    #allocation4 [shape = 's32[1]{0}', space=sflag, size = 0x4, scoped, tag = 'scoped memory for tpu_custom_call.1']
    #allocation5 [shape = 's32[1]{0}', space=sflag, size = 0x4, scoped, tag = 'scoped memory for tpu_custom_call.1']
    #allocation6 [shape = 'u8[4096]{0}', space=vmem, size = 0x1000, scoped, tag = 'input window, operand 1, single buffered']
    #allocation7 [shape = 's32[1]{0}', space=sflag, size = 0x4, scoped, tag = 'scoped memory for tpu_custom_call.1']
    #allocation8 [shape = 'u8[8192]{0}', space=vmem, size = 0x2000, scoped, tag = 'input window, operand 2, single buffered']
    #allocation9 [shape = 'u8[512]{0}', space=vmem, size = 0x400, scoped, tag = 'output window, operand 0, single buffered']
    %12 = vsyncpa [#allocation4], 0
    %13 = vsyncpa [#allocation7], 0
    %14 = vsyncpa [#allocation5], 0
    // Predicated region
    $region2: #{tpu_custom_call.1} parent=1 // pred_check
      _
    $region3: #{tpu_custom_call.1} parent=1 // pred_check_branch
      %16 = sbr.rel (0) target = $region5
    $region4: #{tpu_custom_call.1} parent=1 // pred_region
      %s18 = ssub.s32 128, 128
      %19 = vsyncadd [#allocation4], %s18
      %s21 = sshll.u32 [#allocation3], 4
      %s22 = int_to_ptr.vmem [resolvable:$true] %s21
      %24 = dma.hbm_to_vmem [thread:$0]  %s0, 128, %s22, [#allocation4]
    $region5: #{tpu_custom_call.1} parent=1 // pred_fallthru
      _
    // Predicated region
    $region6: #{tpu_custom_call.1} parent=1 // pred_check
      _
    $region7: #{tpu_custom_call.1} parent=1 // pred_check_branch
      %26 = sbr.rel (0) target = $region9
    $region8: #{tpu_custom_call.1} parent=1 // pred_region
      %s28 = ssub.s32 128, 128
      %29 = vsyncadd [#allocation7], %s28
      %s31 = sshll.u32 [#allocation6], 4
      %s32 = int_to_ptr.vmem [resolvable:$true] %s31
      %34 = dma.hbm_to_vmem [thread:$0]  %s1, 128, %s32, [#allocation7]
    $region9: #{tpu_custom_call.1} parent=1 // pred_fallthru
      _
    // Predicated region
    $region10: #{tpu_custom_call.1} parent=1 // pred_check
      _
    $region11: #{tpu_custom_call.1} parent=1 // pred_check_branch
      %36 = sbr.rel (0) target = $region13
    $region12: #{tpu_custom_call.1} parent=1 // pred_region
      %s38 = ssub.s32 256, 256
      %39 = vsyncadd [#allocation7], %s38
      %s40 = sshll.u32 [#allocation8], 4
      %s41 = int_to_ptr.vmem [resolvable:$true] %s40
      %46 = dma.hbm_to_vmem [thread:$0]  %s2, 256, %s41, [#allocation7], 128, 128, 8
    $region13: #{tpu_custom_call.1} parent=1 // pred_fallthru
      _
    // Predicated region
    $region14: #{tpu_custom_call.1} parent=1 // pred_check
      _
    $region15: #{tpu_custom_call.1} parent=1 // pred_check_branch
      %48 = sbr.rel (0) target = $region17
    $region16: #{tpu_custom_call.1} parent=1 // pred_region
      _
    $region17: #{tpu_custom_call.1} parent=1 // pred_fallthru
      _
    // Predicated region
    $region18: #{tpu_custom_call.1} parent=1 // pred_check
      _
    $region19: #{tpu_custom_call.1} parent=1 // pred_check_branch
      %50 = sbr.rel (0) target = $region21
    $region20: #{tpu_custom_call.1} parent=1 // pred_region
      _
    $region21: #{tpu_custom_call.1} parent=1 // pred_fallthru
      _
    // Predicated region
    $region22: #{tpu_custom_call.1} parent=1 // pred_check
      _
    $region23: #{tpu_custom_call.1} parent=1 // pred_check_branch
      %52 = sbr.rel (0) target = $region25
    $region24: #{tpu_custom_call.1} parent=1 // pred_region
      _
    $region25: #{tpu_custom_call.1} parent=1 // pred_fallthru
      _
    // Predicated region
    $region26: #{tpu_custom_call.1} parent=1 // pred_check
      _
    $region27: #{tpu_custom_call.1} parent=1 // pred_check_branch
      %54 = sbr.rel (0) target = $region29
    $region28: #{tpu_custom_call.1} parent=1 // pred_region
      %55 = dma.done [#allocation4], 128
    $region29: #{tpu_custom_call.1} parent=1 // pred_fallthru
      _
    // Predicated region
    $region30: #{tpu_custom_call.1} parent=1 // pred_check
      _
    $region31: #{tpu_custom_call.1} parent=1 // pred_check_branch
      %57 = sbr.rel (0) target = $region33
    $region32: #{tpu_custom_call.1} parent=1 // pred_region
      %58 = dma.done [#allocation7], 128
    $region33: #{tpu_custom_call.1} parent=1 // pred_fallthru
      _
    // Predicated region
    $region34: #{tpu_custom_call.1} parent=1 // pred_check
      _
    $region35: #{tpu_custom_call.1} parent=1 // pred_check_branch
      %60 = sbr.rel (0) target = $region37
    $region36: #{tpu_custom_call.1} parent=1 // pred_region
      %61 = dma.done [#allocation7], 256
    $region37: #{tpu_custom_call.1} parent=1 // pred_fallthru
      _
    %v62 = vld [vmem:[#allocation3] sm:$0xff]
    %v63 = vld [vmem:[#allocation8] sm:$0xff]
    %v64 = vld [vmem:[#allocation8 + $0x8] sm:$0xff]
    %v65 = vld [vmem:[#allocation6] sm:$0xff]
    %v66 = vld [vmem:[%s3] sm:$0xff]
    %vm67 = vcmask 64512
    %v69 = vsel %vm67, %v65, 0
    %71 = vmatprep.subr.mxu0 0.0
    %72 = vmatpush1.msra.mxu0 %v66
    %73 = vmatprep.subr.mxu0 0.0
    %74 = vmatpush1.msra.mxu0 0.0
    %75 = vmatprep.subr.mxu0 0.0
    %76 = vmatpush1.msra.mxu0 0.0
    %77 = vmatprep.subr.mxu0 0.0
    %78 = vmatpush1.msra.mxu0 0.0
    %79 = vmatprep.subr.mxu0 0.0
    %80 = vmatpush1.msra.mxu0 0.0
    %81 = vmatprep.subr.mxu0 0.0
    %82 = vmatpush1.msra.mxu0 0.0
    %83 = vmatprep.subr.mxu0 0.0
    %84 = vmatpush1.msra.mxu0 0.0
    %85 = vmatprep.subr.mxu0 0.0
    %86 = vmatpush1.msra.mxu0 0.0
    %87 = vmatprep.subr.mxu0 0.0
    %88 = vmatpush1.msra.mxu0 0.0
    %89 = vmatprep.subr.mxu0 0.0
    %90 = vmatpush1.msra.mxu0 0.0
    %91 = vmatprep.subr.mxu0 0.0
    %92 = vmatpush1.msra.mxu0 0.0
    %93 = vmatprep.subr.mxu0 0.0
    %94 = vmatpush1.msra.mxu0 0.0
    %95 = vmatprep.subr.mxu0 0.0
    %96 = vmatpush1.msra.mxu0 0.0
    %97 = vmatprep.subr.mxu0 0.0
    %98 = vmatpush1.msra.mxu0 0.0
    %99 = vmatprep.subr.mxu0 0.0
    %100 = vmatpush1.msra.mxu0 0.0
    %101 = vmatprep.subr.mxu0 0.0
    %102 = vmatpush1.msra.mxu0 0.0
    %103 = vmatprep.subr.mxu0 0.0
    %104 = vmatpush1.msra.mxu0 0.0
    %105 = vmatprep.subr.mxu0 0.0
    %106 = vmatpush1.msra.mxu0 0.0
    %107 = vmatprep.subr.mxu0 0.0
    %108 = vmatpush1.msra.mxu0 0.0
    %109 = vmatprep.subr.mxu0 0.0
    %110 = vmatpush1.msra.mxu0 0.0
    %111 = vmatprep.subr.mxu0 0.0
    %112 = vmatpush1.msra.mxu0 0.0
    %113 = vmatprep.subr.mxu0 0.0
    %114 = vmatpush1.msra.mxu0 0.0
    %115 = vmatprep.subr.mxu0 0.0
    %116 = vmatpush1.msra.mxu0 0.0
    %117 = vmatprep.subr.mxu0 0.0
    %118 = vmatpush1.msra.mxu0 0.0
    %119 = vmatprep.subr.mxu0 0.0
    %120 = vmatpush1.msra.mxu0 0.0
    %121 = vmatprep.subr.mxu0 0.0
    %122 = vmatpush1.msra.mxu0 0.0
    %123 = vmatprep.subr.mxu0 0.0
    %124 = vmatpush1.msra.mxu0 0.0
    %125 = vmatprep.subr.mxu0 0.0
    %126 = vmatpush1.msra.mxu0 0.0
    %127 = vmatprep.subr.mxu0 0.0
    %128 = vmatpush1.msra.mxu0 0.0
    %129 = vmatprep.subr.mxu0 0.0
    %130 = vmatpush1.msra.mxu0 0.0
    %131 = vmatprep.subr.mxu0 0.0
    %132 = vmatpush1.msra.mxu0 0.0
    %133 = vmatprep.subr.mxu0 0.0
    %134 = vmatpush1.msra.mxu0 0.0
    %135 = vmatprep.mubr.f32.mxu0 0.0
    %136 = vmatmul.mubr.f32.gmra.mrb[0].mxu0 %v69
    %v137 = vpop.f32.mrb[0].mxu0
    %v138 = vadd.f32 0.0, %v137
    %v139 = vpop.f32.mrb[0].mxu0
    %140 = vdwg.mxu0
    %vm141 = vcmask 130048
    %v143 = vsel %vm141, %v62, 0
    %145 = vmatprep.subr.mxu0 0.0
    %146 = vmatpush1.msra.mxu0 %v63
    %147 = vmatprep.subr.mxu0 0.0
    %148 = vmatpush1.msra.mxu0 %v64
    %149 = vmatprep.subr.mxu0 0.0
    %150 = vmatpush1.msra.mxu0 0.0
    %151 = vmatprep.subr.mxu0 0.0
    %152 = vmatpush1.msra.mxu0 0.0
    %153 = vmatprep.subr.mxu0 0.0
    %154 = vmatpush1.msra.mxu0 0.0
    %155 = vmatprep.subr.mxu0 0.0
    %156 = vmatpush1.msra.mxu0 0.0
    %157 = vmatprep.subr.mxu0 0.0
    %158 = vmatpush1.msra.mxu0 0.0
    %159 = vmatprep.subr.mxu0 0.0
    %160 = vmatpush1.msra.mxu0 0.0
    %161 = vmatprep.subr.mxu0 0.0
    %162 = vmatpush1.msra.mxu0 0.0
    %163 = vmatprep.subr.mxu0 0.0
    %164 = vmatpush1.msra.mxu0 0.0
    %165 = vmatprep.subr.mxu0 0.0
    %166 = vmatpush1.msra.mxu0 0.0
    %167 = vmatprep.subr.mxu0 0.0
    %168 = vmatpush1.msra.mxu0 0.0
    %169 = vmatprep.subr.mxu0 0.0
    %170 = vmatpush1.msra.mxu0 0.0
    %171 = vmatprep.subr.mxu0 0.0
    %172 = vmatpush1.msra.mxu0 0.0
    %173 = vmatprep.subr.mxu0 0.0
    %174 = vmatpush1.msra.mxu0 0.0
    %175 = vmatprep.subr.mxu0 0.0
    %176 = vmatpush1.msra.mxu0 0.0
    %177 = vmatprep.subr.mxu0 0.0
    %178 = vmatpush1.msra.mxu0 0.0
    %179 = vmatprep.subr.mxu0 0.0
    %180 = vmatpush1.msra.mxu0 0.0
    %181 = vmatprep.subr.mxu0 0.0
    %182 = vmatpush1.msra.mxu0 0.0
    %183 = vmatprep.subr.mxu0 0.0
    %184 = vmatpush1.msra.mxu0 0.0
    %185 = vmatprep.subr.mxu0 0.0
    %186 = vmatpush1.msra.mxu0 0.0
    %187 = vmatprep.subr.mxu0 0.0
    %188 = vmatpush1.msra.mxu0 0.0
    %189 = vmatprep.subr.mxu0 0.0
    %190 = vmatpush1.msra.mxu0 0.0
    %191 = vmatprep.subr.mxu0 0.0
    %192 = vmatpush1.msra.mxu0 0.0
    %193 = vmatprep.subr.mxu0 0.0
    %194 = vmatpush1.msra.mxu0 0.0
    %195 = vmatprep.subr.mxu0 0.0
    %196 = vmatpush1.msra.mxu0 0.0
    %197 = vmatprep.subr.mxu0 0.0
    %198 = vmatpush1.msra.mxu0 0.0
    %199 = vmatprep.subr.mxu0 0.0
    %200 = vmatpush1.msra.mxu0 0.0
    %201 = vmatprep.subr.mxu0 0.0
    %202 = vmatpush1.msra.mxu0 0.0
    %203 = vmatprep.subr.mxu0 0.0
    %204 = vmatpush1.msra.mxu0 0.0
    %205 = vmatprep.subr.mxu0 0.0
    %206 = vmatpush1.msra.mxu0 0.0
    %207 = vmatprep.subr.mxu0 0.0
    %208 = vmatpush1.msra.mxu0 0.0
    %209 = vmatprep.mubr.f32.mxu0 0.0
    %210 = vmatmul.mubr.f32.gmra.mrb[0].mxu0 %v143
    %v211 = vpop.f32.mrb[0].mxu0
    %v212 = vadd.f32 %v138, %v211
    %v213 = vpop.f32.mrb[0].mxu0
    %214 = vdwg.mxu0
    %v215 = vld [vmem:[%s4] sm:$0x3]
    %v216 = vlaneseq
    %v217 = vshrl.u32 %v216, 7
    %v218 = vsub.s32 0, %v217
    %v219 = vrot.slane %v215, %v218
    %v220 = vadd.f32 %v212, %v219
    %v221 = vmax.f32 %v220, 0.0
    %v222 = vlaneseq
    %v223 = vshrl.u32 %v222, 7
    %v224 = vsub.s32 1, %v223
    %v225 = vrot.slane %v215, %v224
    %v226 = vmul.f32 %v221, %v225
    %227 = vadd.xlane.f32.xlu0 %v226
    %v228 = vpop.xlane.xlu0 %227
    %s229 = sld [smem:[#allocation2]]
    %v230 = vstv %s229
    %v231 = vadd.f32 %v228, %v230
    %v233 = vlaneseq
    %v234 = vand.u32 %v233, 127
    %v235 = vlaneseq
    %v236 = vshrl.u32 %v235, 7
    %v237 = vsub.s32 %v234, %v236
    %v238 = vrot.slane %v231, %v237
    %vm240 = vcmask 57344
    %241 = vst.msk [vmem:[#allocation9] sm:$0x1] %vm240, %v238
    // Predicated region
    $region38: #{tpu_custom_call.1} parent=1 // pred_check
      _
    $region39: #{tpu_custom_call.1} parent=1 // pred_check_branch
      %243 = sbr.rel (0) target = $region41
    $region40: #{tpu_custom_call.1} parent=1 // pred_region
      %s245 = ssub.s32 16, 16
      %246 = vsyncadd [#allocation5], %s245
      %s248 = sshll.u32 [#allocation9], 4
      %s249 = int_to_ptr.vmem [resolvable:$true] %s248
      %251 = dma.vmem_to_hbm [thread:$0]  %s249, 16, %s6, [#allocation5]
    $region41: #{tpu_custom_call.1} parent=1 // pred_fallthru
      _
    // Predicated region
    $region42: #{tpu_custom_call.1} parent=1 // pred_check
      _
    $region43: #{tpu_custom_call.1} parent=1 // pred_check_branch
      %253 = sbr.rel (0) target = $region45
    $region44: #{tpu_custom_call.1} parent=1 // pred_region
      %254 = dma.done [#allocation5], 16
    $region45: #{tpu_custom_call.1} parent=1 // pred_fallthru
      _
    %255 = vsyncpa [#allocation4], 1
    %256 = vsyncpa [#allocation7], 1
    %257 = vsyncpa [#allocation5], 1

</llo_original>
